<compile_context>
chip_gen: v7x
topology: tpu7x:2x2x1
jax: 0.10.0
libtpu: 0.0.40
codegen_flags: <defaults>
</compile_context>

<pallas_src>
import functools

import jax
import jax.numpy as jnp
from jax.experimental import pallas as pl
from jax.experimental.pallas import tpu as pltpu


_LANE = 128                      # keep the spatial (last) dim a multiple of the lane width
_TARGET_BLOCK_BYTES = 2 << 20    # ~2 MiB input block; x2 (in/out) x2 (double-buffer) ~ 8 MiB VMEM
_VMEM_LIMIT_BYTES = 48 << 20     # above v5e(16)/v6e(32) scoped defaults, headroom vs v7x 64 MiB


def _channel_attention_kernel(x_ref, w1_ref, w2_ref, o_ref, *, hw_true):
    """One grid step == TB batch elements.

    x_ref / o_ref : (TB, C, HW_pad) f32, zero-padded past hw_true (HW_pad % 128 == 0)
    w1_ref        : (Cr, C)   first 1x1 conv weight (no bias)
    w2_ref        : (C, Cr)   second 1x1 conv weight (no bias)
    """
    tb, c, hw_pad = x_ref.shape

    x = x_ref[...]                                              # (TB, C, HWp)

    # ---- pooling --------------------------------------------------------
    # avg: padded lanes are zero, so the sum is exact; divide by the *true* HW.
    avg = jnp.sum(x, axis=-1) * (1.0 / hw_true)                 # (TB, C)
    # max: mask padded lanes with -inf so they can never win.
    if hw_pad != hw_true:
        lane = jax.lax.broadcasted_iota(jnp.int32, (tb, c, hw_pad), 2)
        x_for_max = jnp.where(lane < hw_true, x, -jnp.inf)
    else:
        x_for_max = x
    mx = jnp.max(x_for_max, axis=-1)                            # (TB, C)

    # ---- fused shared MLP: one pass over the stacked avg/max rows -------
    pooled = jnp.concatenate([avg, mx], axis=0)                 # (2*TB, C)
    h = jax.lax.dot_general(pooled, w1_ref[...],
                            (((1,), (1,)), ((), ())),
                            preferred_element_type=jnp.float32)  # (2*TB, Cr)
    h = jnp.maximum(h, 0.0)
    y = jax.lax.dot_general(h, w2_ref[...],
                            (((1,), (1,)), ((), ())),
                            preferred_element_type=jnp.float32)  # (2*TB, C)

    scale = jax.nn.sigmoid(y[:tb] + y[tb:])                     # (TB, C)

    # ---- scale: re-read x_ref so the big tile is not kept live across the MLP
    o_ref[...] = (x_ref[...] * scale[:, :, None]).astype(o_ref.dtype)


def _pick_tb(batch, bytes_per_elem, target_bytes=_TARGET_BLOCK_BYTES):
    """Largest divisor of `batch` whose input block stays <= target_bytes (>= 1)."""
    tb = max(1, min(batch, target_bytes // max(bytes_per_elem, 1)))
    while batch % tb:
        tb -= 1
    return tb


@jax.jit
def channel_attention(x_nchw, w1, w2):
    """x_nchw: (B, C, H, W) f32; w1: (C//r, C); w2: (C, C//r)."""
    B, C, H, W = x_nchw.shape
    HW = H * W
    HW_pad = ((HW + _LANE - 1) // _LANE) * _LANE

    x = x_nchw.reshape(B, C, HW)
    if HW_pad != HW:
        # zero padding keeps the pooling sum exact; max is masked inside the kernel
        x = jnp.pad(x, ((0, 0), (0, 0), (0, HW_pad - HW)))

    elem_bytes = C * HW_pad * x.dtype.itemsize
    # TODO(synk): if one (C, HW_pad) element alone exceeds the VMEM budget
    # (e.g. C=512, 128x128 spatial on v7x), switch to an HW-tiled two-pass
    # scheme (reduce pass -> (C,1) stats, then a scale pass).
    TB = _pick_tb(B, elem_bytes)
    grid = (B // TB,)

    out = pl.pallas_call(
        functools.partial(_channel_attention_kernel, hw_true=HW),
        out_shape=jax.ShapeDtypeStruct((B, C, HW_pad), x.dtype),
        grid_spec=pltpu.PrefetchScalarGridSpec(
            num_scalar_prefetch=0,
            grid=grid,
            in_specs=[
                pl.BlockSpec((TB, C, HW_pad), lambda b: (b, 0, 0)),
                pl.BlockSpec(w1.shape, lambda b: (0, 0)),
                pl.BlockSpec(w2.shape, lambda b: (0, 0)),
            ],
            out_specs=pl.BlockSpec((TB, C, HW_pad), lambda b: (b, 0, 0)),
        ),
        compiler_params=pltpu.CompilerParams(
            dimension_semantics=("parallel",),
            vmem_limit_bytes=_VMEM_LIMIT_BYTES),
    )(x, w1, w2)

    if HW_pad != HW:
        out = out[:, :, :HW]
    return out.reshape(B, C, H, W)


def channel_attention_ref(x, w1, w2):
    # pure-JAX reference mirroring the PyTorch forward
    avg = jnp.mean(x, axis=(2, 3))                              # (B, C)
    mx = jnp.max(x, axis=(2, 3))                                # (B, C)

    def mlp(v):                                                 # v: (B, C)
        h = jnp.maximum(v @ w1.T, 0.0)                          # (B, C//r)
        return h @ w2.T                                         # (B, C)

    out = mlp(avg) + mlp(mx)
    scale = jax.nn.sigmoid(out)[:, :, None, None]
    return scale * x


def _run_case(key, B, C, H, W, reduction):
    Cr = C // reduction
    kx, k1, k2 = jax.random.split(key, 3)
    x = jax.random.normal(kx, (B, C, H, W), dtype=jnp.float32)
    w1 = jax.random.uniform(k1, (Cr, C), dtype=jnp.float32,
                            minval=-1.0, maxval=1.0) * (1.0 / jnp.sqrt(C))
    w2 = jax.random.uniform(k2, (C, Cr), dtype=jnp.float32,
                            minval=-1.0, maxval=1.0) * (1.0 / jnp.sqrt(Cr))

    y = channel_attention(x, w1, w2)
    jax.block_until_ready(y)

    y_ref = channel_attention_ref(x, w1, w2)
    assert y.shape == (B, C, H, W)
    assert jnp.allclose(y, y_ref, atol=1e-5, rtol=1e-5), \
        f"mismatch vs reference at shape {(B, C, H, W)}"


if __name__ == "__main__":
    key = jax.random.PRNGKey(0)
    k_a, k_b = jax.random.split(key)

    # main case: lane-dense spatial dim (16*16 = 256, multiple of 128)
    _run_case(k_a, B=2, C=32, H=16, W=16, reduction=16)
    # padded case: HW = 49 -> padded to 128, exercises masked max / true-HW mean
    _run_case(k_b, B=3, C=16, H=7, W=7, reduction=8)

    print("KERNEL_OK")
</pallas_src>

<mosaic_0001>
module attributes {stable_mosaic.version = 11 : i64} {
  func.func @_channel_attention_kernel(%arg0: i32, %arg1: memref<2x32x256xf32, #tpu.memory_space<vmem>>, %arg2: memref<2x32xf32, #tpu.memory_space<vmem>>, %arg3: memref<32x2xf32, #tpu.memory_space<vmem>>, %arg4: memref<2x32x256xf32, #tpu.memory_space<vmem>>) attributes {dimension_semantics = [#tpu.dimension_semantics<parallel>], iteration_bounds = array<i64: 1>, scalar_prefetch = 0 : i64, scratch_operands = 0 : i64, tpu.core_type = #tpu.core_type<tc>, window_params = [{transform_indices = @transform_0, window_bounds = array<i64: 2, 32, 256>}, {pipeline_mode = #tpu.pipeline_mode<synchronous>, transform_indices = @transform_1, window_bounds = array<i64: 2, 32>}, {pipeline_mode = #tpu.pipeline_mode<synchronous>, transform_indices = @transform_2, window_bounds = array<i64: 32, 2>}, {transform_indices = @transform_3, window_bounds = array<i64: 2, 32, 256>}]} {
    %c0 = arith.constant 0 : index
    %c0_0 = arith.constant 0 : index
    %c0_1 = arith.constant 0 : index
    %0 = vector.load %arg1[%c0, %c0_0, %c0_1] : memref<2x32x256xf32, #tpu.memory_space<vmem>>, vector<2x32x256xf32>
    %cst = arith.constant dense<0.000000e+00> : vector<2x32xf32>
    %1 = vector.multi_reduction <add>, %0, %cst [2] : vector<2x32x256xf32> to vector<2x32xf32>
    %cst_2 = arith.constant 3.906250e-03 : f32
    %2 = vector.broadcast %cst_2 : f32 to vector<2x32xf32>
    %3 = arith.mulf %1, %2 : vector<2x32xf32>
    %cst_3 = arith.constant dense<0xFF800000> : vector<2x32xf32>
    %4 = vector.multi_reduction <maximumf>, %0, %cst_3 [2] : vector<2x32x256xf32> to vector<2x32xf32>
    %5 = tpu.concatenate %3, %4 in 0 : vector<2x32xf32>, vector<2x32xf32> -> vector<4x32xf32>
    %c0_4 = arith.constant 0 : index
    %c0_5 = arith.constant 0 : index
    %6 = vector.load %arg2[%c0_4, %c0_5] : memref<2x32xf32, #tpu.memory_space<vmem>>, vector<2x32xf32>
    %cst_6 = arith.constant dense<0.000000e+00> : vector<4x2xf32>
    %7 = tpu.matmul %5, %6, %cst_6 {dimension_numbers = #tpu.dot_dimension_numbers<[1], [1], [0], [0], [0, 0, 1, 0], [], []>} : vector<4x32xf32>, vector<2x32xf32>, vector<4x2xf32> -> vector<4x2xf32>
    %cst_7 = arith.constant 0.000000e+00 : f32
    %8 = vector.broadcast %cst_7 : f32 to vector<4x2xf32>
    %9 = arith.maximumf %7, %8 : vector<4x2xf32>
    %c0_8 = arith.constant 0 : index
    %c0_9 = arith.constant 0 : index
    %10 = vector.load %arg3[%c0_8, %c0_9] : memref<32x2xf32, #tpu.memory_space<vmem>>, vector<32x2xf32>
    %cst_10 = arith.constant dense<0.000000e+00> : vector<4x32xf32>
    %11 = tpu.matmul %9, %10, %cst_10 {dimension_numbers = #tpu.dot_dimension_numbers<[1], [1], [0], [0], [0, 0, 1, 0], [], []>} : vector<4x2xf32>, vector<32x2xf32>, vector<4x32xf32> -> vector<4x32xf32>
    %12 = vector.extract_strided_slice %11 {offsets = [0, 0], sizes = [2, 32], strides = [1, 1]} : vector<4x32xf32> to vector<2x32xf32>
    %13 = vector.extract_strided_slice %11 {offsets = [2, 0], sizes = [2, 32], strides = [1, 1]} : vector<4x32xf32> to vector<2x32xf32>
    %14 = arith.addf %12, %13 : vector<2x32xf32>
    %15 = arith.negf %14 : vector<2x32xf32>
    %16 = math.exp %15 : vector<2x32xf32>
    %cst_11 = arith.constant 1.000000e+00 : f32
    %17 = vector.broadcast %cst_11 : f32 to vector<2x32xf32>
    %18 = arith.addf %17, %16 : vector<2x32xf32>
    %19 = arith.divf %17, %18 : vector<2x32xf32>
    %c0_12 = arith.constant 0 : index
    %c0_13 = arith.constant 0 : index
    %c0_14 = arith.constant 0 : index
    %20 = vector.load %arg1[%c0_12, %c0_13, %c0_14] : memref<2x32x256xf32, #tpu.memory_space<vmem>>, vector<2x32x256xf32>
    %21 = vector.shape_cast %19 : vector<2x32xf32> to vector<2x32x1xf32>
    %22 = vector.broadcast %21 : vector<2x32x1xf32> to vector<2x32x256xf32>
    %23 = arith.mulf %20, %22 : vector<2x32x256xf32>
    %c0_15 = arith.constant 0 : index
    %c0_16 = arith.constant 0 : index
    %c0_17 = arith.constant 0 : index
    %24 = vector.load %arg4[%c0_15, %c0_16, %c0_17] : memref<2x32x256xf32, #tpu.memory_space<vmem>>, vector<2x32x256xf32>
    tpu.vector_store %arg4[%c0_15, %c0_16, %c0_17], %23 {strides = array<i32>} : memref<2x32x256xf32, #tpu.memory_space<vmem>>, vector<2x32x256xf32>,
    return
  }
  func.func @transform_0(%arg0: i32) -> (i32, i32, i32) {
    %c0_i32 = arith.constant 0 : i32
    %c0_i32_0 = arith.constant 0 : i32
    %c0_i32_1 = arith.constant 0 : i32
    return %arg0, %c0_i32, %c0_i32_0 : i32, i32, i32
  }
  func.func @transform_1(%arg0: i32) -> (i32, i32) {
    %c0_i32 = arith.constant 0 : i32
    %c0_i32_0 = arith.constant 0 : i32
    %c0_i32_1 = arith.constant 0 : i32
    return %c0_i32, %c0_i32_0 : i32, i32
  }
  func.func @transform_2(%arg0: i32) -> (i32, i32) {
    %c0_i32 = arith.constant 0 : i32
    %c0_i32_0 = arith.constant 0 : i32
    %c0_i32_1 = arith.constant 0 : i32
    return %c0_i32, %c0_i32_0 : i32, i32
  }
  func.func @transform_3(%arg0: i32) -> (i32, i32, i32) {
    %c0_i32 = arith.constant 0 : i32
    %c0_i32_0 = arith.constant 0 : i32
    %c0_i32_1 = arith.constant 0 : i32
    return %arg0, %c0_i32, %c0_i32_0 : i32, i32, i32
  }
}

</mosaic_0001>

<llo_original>
// kernel: channel_attention.1
$region0: #{channel_attention.1}
  #allocation0 [shape = 'u32[]', space=smem, size = 0x4, offset = 0x4, fixed_abs, tag = 'smem constant byte address 0x4 - core index']
  #allocation1 [shape = 'u32[144,128]{1,0:T(1,128)}', space=vmem, size = 0x12000, scoped, tag = 'internal scratch']
  %s0 = inlined_call_operand.vmem [shape: f32[2,32,256], index: 0, kind: input, shape index: {}]
  %s1 = inlined_call_operand.vmem [shape: f32[2,32], index: 1, kind: input, shape index: {}]
  %s2 = inlined_call_operand.vmem [shape: f32[32,2], index: 2, kind: input, shape index: {}]
  %s3 = inlined_call_operand.vmem [shape: f32[2,32,256], index: 3, kind: output, shape index: {}]
  %s4 = sld [smem:[#allocation0]]
  $region22: #{channel_attention.1} parent=0
    _
  %s6 = ssub.s32 1, %s4
  %s7 = scalar_select 0, %s6, %s4
  // Predicated region
  $region2: #{channel_attention.1} parent=0 // pred_check
    _
  $region3: #{channel_attention.1} parent=0 // pred_check_branch
    %9 = sbr.rel (0) target = $region5
  $region4: #{channel_attention.1} parent=0 // pred_region
    _
  $region5: #{channel_attention.1} parent=0 // pred_fallthru
    _
  // Predicated region
  $region6: #{channel_attention.1} parent=0 // pred_check
    _
  $region7: #{channel_attention.1} parent=0 // pred_check_branch
    %11 = sbr.rel (0) target = $region9
  $region8: #{channel_attention.1} parent=0 // pred_region
    _
  $region9: #{channel_attention.1} parent=0 // pred_fallthru
    _
  // Predicated region
  $region10: #{channel_attention.1} parent=0 // pred_check
    _
  $region11: #{channel_attention.1} parent=0 // pred_check_branch
    %13 = sbr.rel (0) target = $region13
  $region12: #{channel_attention.1} parent=0 // pred_region
    _
  $region13: #{channel_attention.1} parent=0 // pred_fallthru
    _
  %v14 = vld [vmem:[%s0] sm:$0xff]
  %v15 = vld [vmem:[%s0 + $0x8] sm:$0xff]
  %v16 = vld [vmem:[%s0 + $0x10] sm:$0xff]
  %v17 = vld [vmem:[%s0 + $0x18] sm:$0xff]
  %v18 = vld [vmem:[%s0 + $0x20] sm:$0xff]
  %v19 = vld [vmem:[%s0 + $0x28] sm:$0xff]
  %v20 = vld [vmem:[%s0 + $0x30] sm:$0xff]
  %v21 = vld [vmem:[%s0 + $0x38] sm:$0xff]
  %v22 = vld [vmem:[%s0 + $0x40] sm:$0xff]
  %v23 = vld [vmem:[%s0 + $0x48] sm:$0xff]
  %v24 = vld [vmem:[%s0 + $0x50] sm:$0xff]
  %v25 = vld [vmem:[%s0 + $0x58] sm:$0xff]
  %v26 = vld [vmem:[%s0 + $0x60] sm:$0xff]
  %v27 = vld [vmem:[%s0 + $0x68] sm:$0xff]
  %v28 = vld [vmem:[%s0 + $0x70] sm:$0xff]
  %v29 = vld [vmem:[%s0 + $0x78] sm:$0xff]
  %v30 = vadd.f32 %v14, %v15
  %31 = vadd.xlane.f32.xlu0 %v30
  %v32 = vpop.xlane.xlu0 %31
  %v33 = vadd.f32 %v16, %v17
  %34 = vadd.xlane.f32.xlu0 %v33
  %v35 = vpop.xlane.xlu0 %34
  %v36 = vadd.f32 %v18, %v19
  %37 = vadd.xlane.f32.xlu0 %v36
  %v38 = vpop.xlane.xlu0 %37
  %v39 = vadd.f32 %v20, %v21
  %40 = vadd.xlane.f32.xlu0 %v39
  %v41 = vpop.xlane.xlu0 %40
  %v42 = vadd.f32 %v22, %v23
  %43 = vadd.xlane.f32.xlu0 %v42
  %v44 = vpop.xlane.xlu0 %43
  %v45 = vadd.f32 %v24, %v25
  %46 = vadd.xlane.f32.xlu0 %v45
  %v47 = vpop.xlane.xlu0 %46
  %v48 = vadd.f32 %v26, %v27
  %49 = vadd.xlane.f32.xlu0 %v48
  %v50 = vpop.xlane.xlu0 %49
  %v51 = vadd.f32 %v28, %v29
  %52 = vadd.xlane.f32.xlu0 %v51
  %v53 = vpop.xlane.xlu0 %52
  %v54 = vmul.f32 %v32, 0.00390625
  %v55 = vmul.f32 %v35, 0.00390625
  %v56 = vmul.f32 %v38, 0.00390625
  %v57 = vmul.f32 %v41, 0.00390625
  %v58 = vmul.f32 %v44, 0.00390625
  %v59 = vmul.f32 %v47, 0.00390625
  %v60 = vmul.f32 %v50, 0.00390625
  %v61 = vmul.f32 %v53, 0.00390625
  %v62 = vmax.f32 %v14, %v15
  %63 = vmax.xlane.f32.xlu0 %v62
  %v64 = vpop.xlane.xlu0 %63
  %v65 = vmax.f32 %v16, %v17
  %66 = vmax.xlane.f32.xlu0 %v65
  %v67 = vpop.xlane.xlu0 %66
  %v68 = vmax.f32 %v18, %v19
  %69 = vmax.xlane.f32.xlu0 %v68
  %v70 = vpop.xlane.xlu0 %69
  %v71 = vmax.f32 %v20, %v21
  %72 = vmax.xlane.f32.xlu0 %v71
  %v73 = vpop.xlane.xlu0 %72
  %v74 = vmax.f32 %v22, %v23
  %75 = vmax.xlane.f32.xlu0 %v74
  %v76 = vpop.xlane.xlu0 %75
  %v77 = vmax.f32 %v24, %v25
  %78 = vmax.xlane.f32.xlu0 %v77
  %v79 = vpop.xlane.xlu0 %78
  %v80 = vmax.f32 %v26, %v27
  %81 = vmax.xlane.f32.xlu0 %v80
  %v82 = vpop.xlane.xlu0 %81
  %v83 = vmax.f32 %v28, %v29
  %84 = vmax.xlane.f32.xlu0 %v83
  %v85 = vpop.xlane.xlu0 %84
  %v94 = vlaneseq
  %v95 = vand.u32 %v94, 127
  %v96 = vlaneseq
  %v97 = vshrl.u32 %v96, 7
  %v98 = vsub.s32 %v95, %v97
  %v99 = vrot.slane %v54, %v98
  %v100 = vadd.s32 %v95, 4294967288
  %v101 = vlaneseq
  %v102 = vshrl.u32 %v101, 7
  %v103 = vsub.s32 %v100, %v102
  %v104 = vrot.slane %v55, %v103
  %vm105 = vcmask 130112
  %v106 = vsel %vm105, %v104, %v99
  %v107 = vadd.s32 %v95, 4294967280
  %v108 = vlaneseq
  %v109 = vshrl.u32 %v108, 7
  %v110 = vsub.s32 %v107, %v109
  %v111 = vrot.slane %v56, %v110
  %vm112 = vcmask 195712
  %v113 = vsel %vm112, %v111, %v106
  %v114 = vadd.s32 %v95, 4294967272
  %v115 = vlaneseq
  %v116 = vshrl.u32 %v115, 7
  %v117 = vsub.s32 %v114, %v116
  %v118 = vrot.slane %v57, %v117
  %vm119 = vcmask 261312
  %v120 = vsel %vm119, %v118, %v113
  %v121 = vlaneseq
  %v122 = vshrl.u32 %v121, 7
  %v123 = vsub.s32 %v95, %v122
  %v124 = vrot.slane %v58, %v123
  %v125 = vlaneseq
  %v126 = vshrl.u32 %v125, 7
  %v127 = vsub.s32 %v100, %v126
  %v128 = vrot.slane %v59, %v127
  %v129 = vsel %vm105, %v128, %v124
  %v130 = vlaneseq
  %v131 = vshrl.u32 %v130, 7
  %v132 = vsub.s32 %v107, %v131
  %v133 = vrot.slane %v60, %v132
  %v134 = vsel %vm112, %v133, %v129
  %v135 = vlaneseq
  %v136 = vshrl.u32 %v135, 7
  %v137 = vsub.s32 %v114, %v136
  %v138 = vrot.slane %v61, %v137
  %v139 = vsel %vm119, %v138, %v134
  %vm140 = vcmask 1041409
  %v141 = vsel %vm140, %v139, %v120
  %v151 = vlaneseq
  %v152 = vshrl.u32 %v151, 7
  %v153 = vsub.s32 %v95, %v152
  %v154 = vrot.slane %v64, %v153
  %v155 = vlaneseq
  %v156 = vshrl.u32 %v155, 7
  %v157 = vsub.s32 %v100, %v156
  %v158 = vrot.slane %v67, %v157
  %v159 = vsel %vm105, %v158, %v154
  %v160 = vlaneseq
  %v161 = vshrl.u32 %v160, 7
  %v162 = vsub.s32 %v107, %v161
  %v163 = vrot.slane %v70, %v162
  %v164 = vsel %vm112, %v163, %v159
  %v165 = vlaneseq
  %v166 = vshrl.u32 %v165, 7
  %v167 = vsub.s32 %v114, %v166
  %v168 = vrot.slane %v73, %v167
  %v169 = vsel %vm119, %v168, %v164
  %v170 = vlaneseq
  %v171 = vshrl.u32 %v170, 7
  %v172 = vsub.s32 %v95, %v171
  %v173 = vrot.slane %v76, %v172
  %v174 = vlaneseq
  %v175 = vshrl.u32 %v174, 7
  %v176 = vsub.s32 %v100, %v175
  %v177 = vrot.slane %v79, %v176
  %v178 = vsel %vm105, %v177, %v173
  %v179 = vlaneseq
  %v180 = vshrl.u32 %v179, 7
  %v181 = vsub.s32 %v107, %v180
  %v182 = vrot.slane %v82, %v181
  %v183 = vsel %vm112, %v182, %v178
  %v184 = vlaneseq
  %v185 = vshrl.u32 %v184, 7
  %v186 = vsub.s32 %v114, %v185
  %v187 = vrot.slane %v85, %v186
  %v188 = vsel %vm119, %v187, %v183
  %vm189 = vcmask 1043459
  %v190 = vsel %vm189, %v188, %v169
  %vm192 = vcmask 1041408
  %v193 = vsel %vm192, %v141, %v190
  %v194 = vld [vmem:[%s1] sm:$0x3]
  %vm195 = vcmask 261120
  %v197 = vsel %vm195, %v193, 0
  %v200 = vsel %vm195, %v194, 0
  %202 = vmatprep.subr.mxu0 0.0
  %203 = vmatpush1.xpose.msra.mxu0 %v200
  %204 = vmatprep.subr.mxu0 0.0
  %205 = vmatpush1.xpose.msra.mxu0 0.0
  %206 = vmatprep.subr.mxu0 0.0
  %207 = vmatpush1.xpose.msra.mxu0 0.0
  %208 = vmatprep.subr.mxu0 0.0
  %209 = vmatpush1.xpose.msra.mxu0 0.0
  %210 = vmatprep.subr.mxu0 0.0
  %211 = vmatpush1.xpose.msra.mxu0 0.0
  %212 = vmatprep.subr.mxu0 0.0
  %213 = vmatpush1.xpose.msra.mxu0 0.0
  %214 = vmatprep.subr.mxu0 0.0
  %215 = vmatpush1.xpose.msra.mxu0 0.0
  %216 = vmatprep.subr.mxu0 0.0
  %217 = vmatpush1.xpose.msra.mxu0 0.0
  %218 = vmatprep.subr.mxu0 0.0
  %219 = vmatpush1.xpose.msra.mxu0 0.0
  %220 = vmatprep.subr.mxu0 0.0
  %221 = vmatpush1.xpose.msra.mxu0 0.0
  %222 = vmatprep.subr.mxu0 0.0
  %223 = vmatpush1.xpose.msra.mxu0 0.0
  %224 = vmatprep.subr.mxu0 0.0
  %225 = vmatpush1.xpose.msra.mxu0 0.0
  %226 = vmatprep.subr.mxu0 0.0
  %227 = vmatpush1.xpose.msra.mxu0 0.0
  %228 = vmatprep.subr.mxu0 0.0
  %229 = vmatpush1.xpose.msra.mxu0 0.0
  %230 = vmatprep.subr.mxu0 0.0
  %231 = vmatpush1.xpose.msra.mxu0 0.0
  %232 = vmatprep.subr.mxu0 0.0
  %233 = vmatpush1.xpose.msra.mxu0 0.0
  %234 = vmatprep.subr.mxu0 0.0
  %235 = vmatpush1.xpose.msra.mxu0 0.0
  %236 = vmatprep.subr.mxu0 0.0
  %237 = vmatpush1.xpose.msra.mxu0 0.0
  %238 = vmatprep.subr.mxu0 0.0
  %239 = vmatpush1.xpose.msra.mxu0 0.0
  %240 = vmatprep.subr.mxu0 0.0
  %241 = vmatpush1.xpose.msra.mxu0 0.0
  %242 = vmatprep.subr.mxu0 0.0
  %243 = vmatpush1.xpose.msra.mxu0 0.0
  %244 = vmatprep.subr.mxu0 0.0
  %245 = vmatpush1.xpose.msra.mxu0 0.0
  %246 = vmatprep.subr.mxu0 0.0
  %247 = vmatpush1.xpose.msra.mxu0 0.0
  %248 = vmatprep.subr.mxu0 0.0
  %249 = vmatpush1.xpose.msra.mxu0 0.0
  %250 = vmatprep.subr.mxu0 0.0
  %251 = vmatpush1.xpose.msra.mxu0 0.0
  %252 = vmatprep.subr.mxu0 0.0
  %253 = vmatpush1.xpose.msra.mxu0 0.0
  %254 = vmatprep.subr.mxu0 0.0
  %255 = vmatpush1.xpose.msra.mxu0 0.0
  %256 = vmatprep.subr.mxu0 0.0
  %257 = vmatpush1.xpose.msra.mxu0 0.0
  %258 = vmatprep.subr.mxu0 0.0
  %259 = vmatpush1.xpose.msra.mxu0 0.0
  %260 = vmatprep.subr.mxu0 0.0
  %261 = vmatpush1.xpose.msra.mxu0 0.0
  %262 = vmatprep.subr.mxu0 0.0
  %263 = vmatpush1.xpose.msra.mxu0 0.0
  %264 = vmatprep.subr.mxu0 0.0
  %265 = vmatpush1.xpose.msra.mxu0 0.0
  %266 = vmatprep.mubr.f32.mxu0 0.0
  %267 = vmatmul.mubr.f32.gmra.mrb[0].mxu0 %v197
  %v268 = vpop.f32.mrb[0].mxu0
  %v269 = vadd.f32 0.0, %v268
  %v270 = vpop.f32.mrb[0].mxu0
  %271 = vdwg.mxu0
  %v272 = vmax.f32 %v269, 0.0
  %v273 = vld [vmem:[%s2] sm:$0xff]
  %v274 = vld [vmem:[%s2 + $0x8] sm:$0xff]
  %v275 = vld [vmem:[%s2 + $0x10] sm:$0xff]
  %v276 = vld [vmem:[%s2 + $0x18] sm:$0xff]
  %vm277 = vcmask 15360
  %v279 = vsel %vm277, %v272, 0
  %v282 = vsel %vm277, %v273, 0
  %v285 = vsel %vm277, %v274, 0
  %v288 = vsel %vm277, %v275, 0
  %v291 = vsel %vm277, %v276, 0
  %293 = vmatprep.subr.mxu0 0.0
  %294 = vmatpush1.xpose.msra.mxu0 %v282
  %295 = vmatprep.subr.mxu0 0.0
  %296 = vmatpush1.xpose.msra.mxu0 %v285
  %297 = vmatprep.subr.mxu0 0.0
  %298 = vmatpush1.xpose.msra.mxu0 %v288
  %299 = vmatprep.subr.mxu0 0.0
  %300 = vmatpush1.xpose.msra.mxu0 %v291
  %301 = vmatprep.subr.mxu0 0.0
  %302 = vmatpush1.xpose.msra.mxu0 0.0
  %303 = vmatprep.subr.mxu0 0.0
  %304 = vmatpush1.xpose.msra.mxu0 0.0
  %305 = vmatprep.subr.mxu0 0.0
  %306 = vmatpush1.xpose.msra.mxu0 0.0
  %307 = vmatprep.subr.mxu0 0.0
  %308 = vmatpush1.xpose.msra.mxu0 0.0
  %309 = vmatprep.subr.mxu0 0.0
  %310 = vmatpush1.xpose.msra.mxu0 0.0
  %311 = vmatprep.subr.mxu0 0.0
  %312 = vmatpush1.xpose.msra.mxu0 0.0
  %313 = vmatprep.subr.mxu0 0.0
  %314 = vmatpush1.xpose.msra.mxu0 0.0
  %315 = vmatprep.subr.mxu0 0.0
  %316 = vmatpush1.xpose.msra.mxu0 0.0
  %317 = vmatprep.subr.mxu0 0.0
  %318 = vmatpush1.xpose.msra.mxu0 0.0
  %319 = vmatprep.subr.mxu0 0.0
  %320 = vmatpush1.xpose.msra.mxu0 0.0
  %321 = vmatprep.subr.mxu0 0.0
  %322 = vmatpush1.xpose.msra.mxu0 0.0
  %323 = vmatprep.subr.mxu0 0.0
  %324 = vmatpush1.xpose.msra.mxu0 0.0
  %325 = vmatprep.subr.mxu0 0.0
  %326 = vmatpush1.xpose.msra.mxu0 0.0
  %327 = vmatprep.subr.mxu0 0.0
  %328 = vmatpush1.xpose.msra.mxu0 0.0
  %329 = vmatprep.subr.mxu0 0.0
  %330 = vmatpush1.xpose.msra.mxu0 0.0
  %331 = vmatprep.subr.mxu0 0.0
  %332 = vmatpush1.xpose.msra.mxu0 0.0
  %333 = vmatprep.subr.mxu0 0.0
  %334 = vmatpush1.xpose.msra.mxu0 0.0
  %335 = vmatprep.subr.mxu0 0.0
  %336 = vmatpush1.xpose.msra.mxu0 0.0
  %337 = vmatprep.subr.mxu0 0.0
  %338 = vmatpush1.xpose.msra.mxu0 0.0
  %339 = vmatprep.subr.mxu0 0.0
  %340 = vmatpush1.xpose.msra.mxu0 0.0
  %341 = vmatprep.subr.mxu0 0.0
  %342 = vmatpush1.xpose.msra.mxu0 0.0
  %343 = vmatprep.subr.mxu0 0.0
  %344 = vmatpush1.xpose.msra.mxu0 0.0
  %345 = vmatprep.subr.mxu0 0.0
  %346 = vmatpush1.xpose.msra.mxu0 0.0
  %347 = vmatprep.subr.mxu0 0.0
  %348 = vmatpush1.xpose.msra.mxu0 0.0
  %349 = vmatprep.subr.mxu0 0.0
  %350 = vmatpush1.xpose.msra.mxu0 0.0
  %351 = vmatprep.subr.mxu0 0.0
  %352 = vmatpush1.xpose.msra.mxu0 0.0
  %353 = vmatprep.subr.mxu0 0.0
  %354 = vmatpush1.xpose.msra.mxu0 0.0
  %355 = vmatprep.subr.mxu0 0.0
  %356 = vmatpush1.xpose.msra.mxu0 0.0
  %357 = vmatprep.mubr.f32.mxu0 0.0
  %358 = vmatmul.mubr.f32.gmra.mrb[0].mxu0 %v279
  %v359 = vpop.f32.mrb[0].mxu0
  %v360 = vadd.f32 0.0, %v359
  %v361 = vpop.f32.mrb[0].mxu0
  %362 = vdwg.mxu0
  %v364 = vrot.slane %v360, 2
  %v366 = vadd.f32 %v360, %v364
  %v367 = vxor.u32 %v366, 2147483648
  %v368 = vmul.f32 %v367, 1.442695
  %v369 = vpow.pop %v368
  %v370 = vadd.f32 %v369, 1.0
  %v371 = vrcp.pop %v370
  %v372 = vmul.f32 1.0, %v371
  %v373 = vlaneseq
  %v374 = vshrl.u32 %v373, 7
  %v375 = vsub.s32 0, %v374
  %v376 = vrot.slane %v372, %v375
  %378 = vbcast.lane.b32.xlu0 %v376, 256
  %v379 = vpop.permute.xlu0 %378
  %s381 = sor.u32 256, 8
  %382 = vbcast.lane.b32.xlu0 %v376, %s381
  %v383 = vpop.permute.xlu0 %382
  %s385 = sor.u32 256, 16
  %386 = vbcast.lane.b32.xlu0 %v376, %s385
  %v387 = vpop.permute.xlu0 %386
  %s389 = sor.u32 256, 24
  %390 = vbcast.lane.b32.xlu0 %v376, %s389
  %v391 = vpop.permute.xlu0 %390
  %v392 = vlaneseq
  %v393 = vshrl.u32 %v392, 7
  %v394 = vsub.s32 1, %v393
  %v395 = vrot.slane %v372, %v394
  %397 = vbcast.lane.b32.xlu0 %v395, 256
  %v398 = vpop.permute.xlu0 %397
  %s400 = sor.u32 256, 8
  %401 = vbcast.lane.b32.xlu0 %v395, %s400
  %v402 = vpop.permute.xlu0 %401
  %s404 = sor.u32 256, 16
  %405 = vbcast.lane.b32.xlu0 %v395, %s404
  %v406 = vpop.permute.xlu0 %405
  %s408 = sor.u32 256, 24
  %409 = vbcast.lane.b32.xlu0 %v395, %s408
  %v410 = vpop.permute.xlu0 %409
  %v411 = vmul.f32 %v14, %v379
  %v412 = vmul.f32 %v15, %v379
  %v413 = vmul.f32 %v16, %v383
  %v414 = vmul.f32 %v17, %v383
  %v415 = vmul.f32 %v18, %v387
  %v416 = vmul.f32 %v19, %v387
  %v417 = vmul.f32 %v20, %v391
  %v418 = vmul.f32 %v21, %v391
  %v419 = vmul.f32 %v22, %v398
  %v420 = vmul.f32 %v23, %v398
  %v421 = vmul.f32 %v24, %v402
  %v422 = vmul.f32 %v25, %v402
  %v423 = vmul.f32 %v26, %v406
  %v424 = vmul.f32 %v27, %v406
  %v425 = vmul.f32 %v28, %v410
  %v426 = vmul.f32 %v29, %v410
  %427 = vst [vmem:[%s3] sm:$0xff] %v411
  %428 = vst [vmem:[%s3 + $0x8] sm:$0xff] %v412
  %429 = vst [vmem:[%s3 + $0x10] sm:$0xff] %v413
  %430 = vst [vmem:[%s3 + $0x18] sm:$0xff] %v414
  %431 = vst [vmem:[%s3 + $0x20] sm:$0xff] %v415
  %432 = vst [vmem:[%s3 + $0x28] sm:$0xff] %v416
  %433 = vst [vmem:[%s3 + $0x30] sm:$0xff] %v417
  %434 = vst [vmem:[%s3 + $0x38] sm:$0xff] %v418
  %435 = vst [vmem:[%s3 + $0x40] sm:$0xff] %v419
  %436 = vst [vmem:[%s3 + $0x48] sm:$0xff] %v420
  %437 = vst [vmem:[%s3 + $0x50] sm:$0xff] %v421
  %438 = vst [vmem:[%s3 + $0x58] sm:$0xff] %v422
  %439 = vst [vmem:[%s3 + $0x60] sm:$0xff] %v423
  %440 = vst [vmem:[%s3 + $0x68] sm:$0xff] %v424
  %441 = vst [vmem:[%s3 + $0x70] sm:$0xff] %v425
  %442 = vst [vmem:[%s3 + $0x78] sm:$0xff] %v426
  // Predicated region
  $region14: #{channel_attention.1} parent=0 // pred_check
    _
  $region15: #{channel_attention.1} parent=0 // pred_check_branch
    %444 = sbr.rel (0) target = $region17
  $region16: #{channel_attention.1} parent=0 // pred_region
    _
  $region17: #{channel_attention.1} parent=0 // pred_fallthru
    _
  // Predicated region
  $region18: #{channel_attention.1} parent=0 // pred_check
    _
  $region19: #{channel_attention.1} parent=0 // pred_check_branch
    %446 = sbr.rel (0) target = $region21
  $region20: #{channel_attention.1} parent=0 // pred_region
    _
  $region21: #{channel_attention.1} parent=0 // pred_fallthru
    _

</llo_original>
